<compile_context>
chip_gen: v7x
topology: tpu7x:2x2x1
jax: 0.10.0
libtpu: 0.0.40
codegen_flags: <defaults>
</compile_context>

<pallas_src>
import jax
import jax.numpy as jnp
from jax import lax
from jax.experimental import pallas as pl
from jax.experimental.pallas import tpu as pltpu

_MIB = 1024 * 1024


def _ce_rowloss_kernel(logits_ref, labels_ref, loss_ref):
    """Per-row softmax cross-entropy for one (TILE_N, C) block.

    logits_ref : VMEM ref, (TILE_N, C), any float dtype (promoted to f32 on the VPU)
    labels_ref : VMEM ref, (TILE_N, 1), int32
    loss_ref   : VMEM ref, (TILE_N, 1), float32 per-row loss (0 for ignored labels)
    """
    x = logits_ref[...].astype(jnp.float32)                  # (T, C)
    lbl = labels_ref[...]                                     # (T, 1) int32
    c = x.shape[-1]

    # (1, C) lane iota broadcast against (T, 1) labels -> no block-sized int32 temp.
    cls_ids = lax.broadcasted_iota(jnp.int32, (1, c), 1)      # (1, C)
    onehot = cls_ids == lbl                                   # (T, C) bool

    # Numerically stable log-sum-exp along the class (lane) axis.  `x - m` has a
    # single consumer (the exp chain); the target logit is gathered from raw `x`.
    m = jnp.max(x, axis=-1, keepdims=True)                    # (T, 1)
    sum_e = jnp.sum(jnp.exp(x - m), axis=-1, keepdims=True)   # (T, 1)
    picked = jnp.sum(jnp.where(onehot, x, jnp.float32(0.0)),
                     axis=-1, keepdims=True)                  # (T, 1)

    # lse - x[label] = (m + log(sum_e)) - picked
    per_row = jnp.log(sum_e) + (m - picked)                   # (T, 1)

    # ignore_index / out-of-range labels -> zero contribution (matches reduction='none')
    valid = jnp.logical_and(lbl >= 0, lbl < c)
    loss_ref[...] = jnp.where(valid, per_row, jnp.float32(0.0))


def _vmem_capacity_bytes():
    try:
        return int(pltpu.get_tpu_info().vmem_capacity_bytes)
    except Exception:
        return 128 * _MIB  # conservative default (v5e/v6e class)


def _choose_tiling(n, c, itemsize):
    """Pick (tile_n, vmem_limit_bytes) in a generation-aware way."""
    vmem_cap = _vmem_capacity_bytes()
    small_vmem = vmem_cap <= 64 * _MIB            # v7x-class parts (64 MiB per TC)
    target_block = (2 if small_vmem else 4) * _MIB

    # dtype-native sublane multiple: 8 for f32, 16 for bf16, 32 for int8/fp8
    sub = max(8, 32 // max(1, itemsize))
    rup = lambda v: ((v + sub - 1) // sub) * sub
    n_pad = rup(n)

    rows = target_block // max(1, c * itemsize)
    rows = max(sub, (rows // sub) * sub)
    # Keep >=2 grid steps when possible so the "parallel" batch axis can shard
    # across v7x's two TensorCores (near-free on single-TC v5e/v6e).
    rows = min(rows, max(sub, rup(-(-n // 2))))
    tile_n = int(min(rows, n_pad))

    # Scoped-VMEM limit from the real footprint: double-buffered input block plus
    # a few f32 block-sized intermediates, with headroom -- not a fixed 32 MiB.
    est = 2 * tile_n * c * itemsize + 4 * tile_n * c * 4 + 2 * _MIB
    if small_vmem:
        vmem_limit = int(min(48 * _MIB, max(32 * _MIB, est)))
    else:
        vmem_limit = 64 * _MIB
    return tile_n, vmem_limit


def cross_entropy_loss(logits, labels, *, loss_weight=1.0, reduction='mean',
                       avg_factor=None):
    """Mirrors CrossEntropyLoss.forward with use_sigmoid=False."""
    assert reduction in ('none', 'mean', 'sum')
    n, c = logits.shape
    itemsize = jnp.dtype(logits.dtype).itemsize
    labels2d = labels.reshape(n, 1).astype(jnp.int32)

    tile_n, vmem_limit = _choose_tiling(n, c, itemsize)
    grid = (pl.cdiv(n, tile_n),)

    cost = pl.CostEstimate(
        flops=5 * n * c,
        transcendentals=n * c,
        bytes_accessed=n * c * itemsize + n * 4 + n * 4,
    )

    per_sample = pl.pallas_call(
        _ce_rowloss_kernel,
        out_shape=jax.ShapeDtypeStruct((n, 1), jnp.float32),
        grid=grid,
        in_specs=[
            pl.BlockSpec((tile_n, c), lambda i: (i, 0)),
            pl.BlockSpec((tile_n, 1), lambda i: (i, 0)),
        ],
        out_specs=pl.BlockSpec((tile_n, 1), lambda i: (i, 0)),
        compiler_params=pltpu.CompilerParams(
            dimension_semantics=("parallel",),
            vmem_limit_bytes=vmem_limit,
        ),
        cost_estimate=cost,
    )(logits, labels2d)[:, 0]

    # weight_reduce_loss (weight=None) + loss_weight: cheap glue, plain JAX.
    if reduction == 'none':
        loss = per_sample
    elif reduction == 'sum':
        loss = jnp.sum(per_sample)
    else:  # 'mean' -- divides by full N (mmdet weight_reduce_loss semantics)
        if avg_factor is None:
            loss = jnp.mean(per_sample)
        else:
            loss = jnp.sum(per_sample) / jnp.float32(avg_factor)
    return jnp.float32(loss_weight) * loss


class CrossEntropyLoss:
    """Thin module-style wrapper matching the PyTorch class interface."""

    def __init__(self, use_sigmoid=False, reduction='mean', loss_weight=1.0):
        assert not use_sigmoid, "use_sigmoid=True (BCE path) not implemented"
        self.reduction = reduction
        self.loss_weight = loss_weight

    def __call__(self, logits, labels, avg_factor=None, reduction_override=None):
        assert reduction_override in (None, 'none', 'mean', 'sum')
        reduction = reduction_override if reduction_override else self.reduction
        return cross_entropy_loss(logits, labels, loss_weight=self.loss_weight,
                                  reduction=reduction, avg_factor=avg_factor)


def _reference_loss(logits_f32, labels, reduction='mean'):
    """Pure-JAX reference: F.cross_entropy(reduction='none') + mean/sum,
    with ignore_index/out-of-range labels contributing 0."""
    n, c = logits_f32.shape
    lse = jax.scipy.special.logsumexp(logits_f32, axis=-1)
    safe_lbl = jnp.clip(labels, 0, c - 1)
    picked = jnp.take_along_axis(logits_f32, safe_lbl[:, None], axis=-1)[:, 0]
    valid = jnp.logical_and(labels >= 0, labels < c)
    per = jnp.where(valid, lse - picked, 0.0)
    if reduction == 'mean':
        return jnp.mean(per)
    if reduction == 'sum':
        return jnp.sum(per)
    return per


if __name__ == "__main__":
    key = jax.random.PRNGKey(0)
    k1, k2, k3, k4 = jax.random.split(key, 4)

    # --- Test 1: small f32 case (batch=8, classes=32), mean reduction ---
    N1, C1 = 8, 32
    logits1 = jax.random.normal(k1, (N1, C1), dtype=jnp.float32)
    labels1 = jax.random.randint(k2, (N1,), 0, C1, dtype=jnp.int32)

    crit = CrossEntropyLoss(use_sigmoid=False, reduction='mean', loss_weight=1.0)
    loss1 = crit(logits1, labels1)
    jax.block_until_ready(loss1)
    ref1 = _reference_loss(logits1, labels1)
    assert jnp.allclose(loss1, ref1, rtol=1e-5, atol=1e-5), (loss1, ref1)

    # --- Test 2: bf16 logits, ragged batch (22 rows, multi-tile grid),
    #             one ignored label (-100), loss_weight=0.5 ---
    N2, C2 = 22, 96
    logits2 = (jax.random.normal(k3, (N2, C2), dtype=jnp.float32) * 3.0).astype(jnp.bfloat16)
    labels2 = jax.random.randint(k4, (N2,), 0, C2, dtype=jnp.int32)
    labels2 = labels2.at[5].set(-100)  # PyTorch default ignore_index

    loss2 = cross_entropy_loss(logits2, labels2, loss_weight=0.5)
    jax.block_until_ready(loss2)
    ref2 = 0.5 * _reference_loss(logits2.astype(jnp.float32), labels2)
    assert jnp.allclose(loss2, ref2, rtol=2e-2, atol=2e-2), (loss2, ref2)

    # --- Test 3: 'sum' and 'none' reductions on the f32 case ---
    loss3 = cross_entropy_loss(logits1, labels1, reduction='sum')
    per3 = cross_entropy_loss(logits1, labels1, reduction='none')
    jax.block_until_ready((loss3, per3))
    assert jnp.allclose(loss3, _reference_loss(logits1, labels1, 'sum'), rtol=1e-5, atol=1e-5)
    assert jnp.allclose(per3, _reference_loss(logits1, labels1, 'none'), rtol=1e-5, atol=1e-5)

    print("KERNEL_OK")
</pallas_src>

<mosaic_0001>
module attributes {stable_mosaic.version = 11 : i64} {
  func.func @_ce_rowloss_kernel(%arg0: i32, %arg1: memref<8x32xf32, #tpu.memory_space<vmem>>, %arg2: memref<8x1xi32, #tpu.memory_space<vmem>>, %arg3: memref<8x1xf32, #tpu.memory_space<vmem>>) attributes {dimension_semantics = [#tpu.dimension_semantics<parallel>], iteration_bounds = array<i64: 1>, scalar_prefetch = 0 : i64, scratch_operands = 0 : i64, tpu.core_type = #tpu.core_type<tc>, window_params = [{transform_indices = @transform_0, window_bounds = array<i64: 8, 32>}, {transform_indices = @transform_1, window_bounds = array<i64: 8, 1>}, {transform_indices = @transform_2, window_bounds = array<i64: 8, 1>}]} {
    %c0 = arith.constant 0 : index
    %c0_0 = arith.constant 0 : index
    %0 = vector.load %arg1[%c0, %c0_0] : memref<8x32xf32, #tpu.memory_space<vmem>>, vector<8x32xf32>
    %c0_1 = arith.constant 0 : index
    %c0_2 = arith.constant 0 : index
    %1 = vector.load %arg2[%c0_1, %c0_2] : memref<8x1xi32, #tpu.memory_space<vmem>>, vector<8x1xi32>
    %2 = tpu.iota {dimensions = array<i32: 1>} : vector<1x32xi32>
    %3 = vector.broadcast %2 : vector<1x32xi32> to vector<8x32xi32>
    %4 = vector.broadcast %1 : vector<8x1xi32> to vector<8x32xi32>
    %5 = arith.cmpi eq, %3, %4 : vector<8x32xi32>
    %cst = arith.constant dense<0xFF800000> : vector<8xf32>
    %6 = vector.multi_reduction <maximumf>, %0, %cst [1] : vector<8x32xf32> to vector<8xf32>
    %7 = vector.shape_cast %6 : vector<8xf32> to vector<8x1xf32>
    %8 = vector.broadcast %7 : vector<8x1xf32> to vector<8x32xf32>
    %9 = arith.subf %0, %8 : vector<8x32xf32>
    %10 = math.exp %9 : vector<8x32xf32>
    %cst_3 = arith.constant dense<0.000000e+00> : vector<8xf32>
    %11 = vector.multi_reduction <add>, %10, %cst_3 [1] : vector<8x32xf32> to vector<8xf32>
    %12 = vector.shape_cast %11 : vector<8xf32> to vector<8x1xf32>
    %cst_4 = arith.constant 0.000000e+00 : f32
    %13 = vector.broadcast %cst_4 : f32 to vector<8x32xf32>
    %14 = arith.select %5, %0, %13 : vector<8x32xi1>, vector<8x32xf32>
    %cst_5 = arith.constant dense<0.000000e+00> : vector<8xf32>
    %15 = vector.multi_reduction <add>, %14, %cst_5 [1] : vector<8x32xf32> to vector<8xf32>
    %16 = vector.shape_cast %15 : vector<8xf32> to vector<8x1xf32>
    %17 = math.log %12 : vector<8x1xf32>
    %18 = arith.subf %7, %16 : vector<8x1xf32>
    %19 = arith.addf %17, %18 : vector<8x1xf32>
    %c0_i32 = arith.constant 0 : i32
    %20 = vector.broadcast %c0_i32 : i32 to vector<8x1xi32>
    %21 = arith.cmpi sge, %1, %20 : vector<8x1xi32>
    %c32_i32 = arith.constant 32 : i32
    %22 = vector.broadcast %c32_i32 : i32 to vector<8x1xi32>
    %23 = arith.cmpi slt, %1, %22 : vector<8x1xi32>
    %24 = arith.andi %21, %23 : vector<8x1xi1>
    %cst_6 = arith.constant 0.000000e+00 : f32
    %25 = vector.broadcast %cst_6 : f32 to vector<8x1xf32>
    %26 = arith.select %24, %19, %25 : vector<8x1xi1>, vector<8x1xf32>
    %c0_7 = arith.constant 0 : index
    %c0_8 = arith.constant 0 : index
    %27 = vector.load %arg3[%c0_7, %c0_8] : memref<8x1xf32, #tpu.memory_space<vmem>>, vector<8x1xf32>
    tpu.vector_store %arg3[%c0_7, %c0_8], %26 {strides = array<i32>} : memref<8x1xf32, #tpu.memory_space<vmem>>, vector<8x1xf32>,
    return
  }
  func.func @transform_0(%arg0: i32) -> (i32, i32) {
    %c0_i32 = arith.constant 0 : i32
    %c0_i32_0 = arith.constant 0 : i32
    return %arg0, %c0_i32 : i32, i32
  }
  func.func @transform_1(%arg0: i32) -> (i32, i32) {
    %c0_i32 = arith.constant 0 : i32
    %c0_i32_0 = arith.constant 0 : i32
    return %arg0, %c0_i32 : i32, i32
  }
  func.func @transform_2(%arg0: i32) -> (i32, i32) {
    %c0_i32 = arith.constant 0 : i32
    %c0_i32_0 = arith.constant 0 : i32
    return %arg0, %c0_i32 : i32, i32
  }
}

</mosaic_0001>

<llo_original>
// kernel: tpu_custom_call.1
$region0: #{tpu_custom_call.1}
  #allocation0 [shape = 'u32[]', space=smem, size = 0x4, offset = 0x4, fixed_abs, tag = 'smem constant byte address 0x4 - core index']
  #allocation1 [shape = 'u32[144,128]{1,0:T(1,128)}', space=vmem, size = 0x12000, scoped, tag = 'internal scratch']
  %s0 = inlined_call_operand.hbm [shape: f32[8,32], index: 0, kind: input, shape index: {}]
  %s1 = inlined_call_operand.hbm [shape: s32[8,1], index: 1, kind: input, shape index: {}]
  %s2 = inlined_call_operand.hbm [shape: f32[8,1], index: 2, kind: output, shape index: {}]
  %s3 = sld [smem:[#allocation0]]
  $region26: #{tpu_custom_call.1} parent=0
    _
  %s5 = ssub.s32 1, %s3
  %s6 = scalar_select 0, %s5, %s3
  $region1: #{tpu_custom_call.1} parent=0
    #allocation2 [shape = 'u8[4096]{0}', space=vmem, size = 0x1000, scoped, tag = 'input window, operand 0, single buffered']
    #allocation3 [shape = 's32[1]{0}', space=sflag, size = 0x4, scoped, tag = 'scoped memory for tpu_custom_call.1']
    #allocation4 [shape = 's32[1]{0}', space=sflag, size = 0x4, scoped, tag = 'scoped memory for tpu_custom_call.1']
    #allocation5 [shape = 'u8[4096]{0}', space=vmem, size = 0x1000, scoped, tag = 'input window, operand 1, single buffered']
    #allocation6 [shape = 's32[1]{0}', space=sflag, size = 0x4, scoped, tag = 'scoped memory for tpu_custom_call.1']
    #allocation7 [shape = 'u8[4096]{0}', space=vmem, size = 0x1000, scoped, tag = 'output window, operand 0, single buffered']
    %7 = vsyncpa [#allocation3], 0
    %8 = vsyncpa [#allocation6], 0
    %9 = vsyncpa [#allocation4], 0
    // Predicated region
    $region2: #{tpu_custom_call.1} parent=1 // pred_check
      _
    $region3: #{tpu_custom_call.1} parent=1 // pred_check_branch
      %11 = sbr.rel (0) target = $region5
    $region4: #{tpu_custom_call.1} parent=1 // pred_region
      %s13 = ssub.s32 128, 128
      %14 = vsyncadd [#allocation3], %s13
      %s16 = sshll.u32 [#allocation2], 4
      %s17 = int_to_ptr.vmem [resolvable:$true] %s16
      %19 = dma.hbm_to_vmem [thread:$0]  %s0, 128, %s17, [#allocation3]
    $region5: #{tpu_custom_call.1} parent=1 // pred_fallthru
      _
    // Predicated region
    $region6: #{tpu_custom_call.1} parent=1 // pred_check
      _
    $region7: #{tpu_custom_call.1} parent=1 // pred_check_branch
      %21 = sbr.rel (0) target = $region9
    $region8: #{tpu_custom_call.1} parent=1 // pred_region
      %s23 = ssub.s32 128, 128
      %24 = vsyncadd [#allocation6], %s23
      %s26 = sshll.u32 [#allocation5], 4
      %s27 = int_to_ptr.vmem [resolvable:$true] %s26
      %29 = dma.hbm_to_vmem [thread:$0]  %s1, 128, %s27, [#allocation6]
    $region9: #{tpu_custom_call.1} parent=1 // pred_fallthru
      _
    // Predicated region
    $region10: #{tpu_custom_call.1} parent=1 // pred_check
      _
    $region11: #{tpu_custom_call.1} parent=1 // pred_check_branch
      %31 = sbr.rel (0) target = $region13
    $region12: #{tpu_custom_call.1} parent=1 // pred_region
      %32 = dma.done [#allocation3], 128
    $region13: #{tpu_custom_call.1} parent=1 // pred_fallthru
      _
    // Predicated region
    $region14: #{tpu_custom_call.1} parent=1 // pred_check
      _
    $region15: #{tpu_custom_call.1} parent=1 // pred_check_branch
      %34 = sbr.rel (0) target = $region17
    $region16: #{tpu_custom_call.1} parent=1 // pred_region
      %35 = dma.done [#allocation6], 128
    $region17: #{tpu_custom_call.1} parent=1 // pred_fallthru
      _
    %v36 = vld [vmem:[#allocation2] sm:$0xff]
    %v37 = vld [vmem:[#allocation5] sm:$0xff]
    %v38 = vlaneseq
    %v39 = vand.u32 %v38, 127
    %40 = vset.pattern.permute.xlu0 0
    %41 = vperm.xlu0 %40, %v37
    %v42 = vpop.permute.xlu0 %41
    %vm43 = vcmp.eq.s32.totalorder %v39, %v42
    %vm44 = vcmask 261120
    %v45 = vsel %vm44, %v36, -inf
    %46 = vmax.xlane.f32.xlu0 %v45
    %v47 = vpop.xlane.xlu0 %46
    %v48 = vsub.f32 %v36, %v47
    %v49 = vmul.f32 %v48, 1.442695
    %v50 = vpow.pop %v49
    %v51 = vsel %vm44, %v50, 0.0
    %52 = vadd.xlane.f32.xlu0 %v51
    %v53 = vpop.xlane.xlu0 %52
    %v54 = vsel %vm43, %v36, 0.0
    %v55 = vsel %vm44, %v54, 0.0
    %56 = vadd.xlane.f32.xlu0 %v55
    %v57 = vpop.xlane.xlu0 %56
    %v58 = vlog2.pop %v53
    %v59 = vmul.f32 %v58, 0.6931472
    %v60 = vsub.f32 %v47, %v57
    %v61 = vadd.f32 %v59, %v60
    %vm62 = vcmp.ge.s32.totalorder %v37, 0
    %vm63 = vcmp.lt.s32.totalorder %v37, 32
    %vm64 = vmand %vm62, %vm63
    %v65 = vsel %vm64, %v61, 0.0
    %vm66 = vcmask 7168
    %67 = vst.msk [vmem:[#allocation7] sm:$0xff] %vm66, %v65
    // Predicated region
    $region18: #{tpu_custom_call.1} parent=1 // pred_check
      _
    $region19: #{tpu_custom_call.1} parent=1 // pred_check_branch
      %69 = sbr.rel (0) target = $region21
    $region20: #{tpu_custom_call.1} parent=1 // pred_region
      %s71 = ssub.s32 128, 128
      %72 = vsyncadd [#allocation4], %s71
      %s74 = sshll.u32 [#allocation7], 4
      %s75 = int_to_ptr.vmem [resolvable:$true] %s74
      %77 = dma.vmem_to_hbm [thread:$0]  %s75, 128, %s2, [#allocation4]
    $region21: #{tpu_custom_call.1} parent=1 // pred_fallthru
      _
    // Predicated region
    $region22: #{tpu_custom_call.1} parent=1 // pred_check
      _
    $region23: #{tpu_custom_call.1} parent=1 // pred_check_branch
      %79 = sbr.rel (0) target = $region25
    $region24: #{tpu_custom_call.1} parent=1 // pred_region
      %80 = dma.done [#allocation4], 128
    $region25: #{tpu_custom_call.1} parent=1 // pred_fallthru
      _
    %81 = vsyncpa [#allocation3], 1
    %82 = vsyncpa [#allocation6], 1
    %83 = vsyncpa [#allocation4], 1

</llo_original>
